<compile_context>
chip_gen: v7x
topology: tpu7x:2x2x1
jax: 0.10.0
libtpu: 0.0.40
codegen_flags: <defaults>
</compile_context>

<pallas_src>
import jax
import jax.numpy as jnp
from jax.experimental import pallas as pl
from jax.experimental.pallas import tpu as pltpu

_LANE = 128


def _round_up(x, m):
    return ((x + m - 1) // m) * m


def _chip_generation():
    """Coarse TPU-generation detection; conservative fallback."""
    try:
        kind = jax.devices()[0].device_kind.lower()
    except Exception:
        return "unknown"
    if "v7" in kind:
        return "v7"
    if "v6" in kind:
        return "v6"
    if "v5" in kind and ("lite" in kind or "v5e" in kind):
        return "v5e"
    if "v5" in kind:
        return "v5"
    return "other"


def _make_swish_kernel(compute_dtype):
    def kernel(x_ref, o_ref):
        # swish(x) = x * sigmoid(x) = 0.5 * x * (1 + tanh(0.5 * x))
        # One EUP op (tanh); the rest is cheap VPU mul/add.
        x = x_ref[...].astype(compute_dtype)
        y = (x * 0.5) * (jnp.tanh(x * 0.5) + 1.0)
        o_ref[...] = y.astype(o_ref.dtype)

    return kernel


def swish(x):
    """Elementwise Swish/SiLU (x * sigmoid(x)) for any shape / float dtype."""
    orig_shape = x.shape
    dtype = x.dtype
    n = int(x.size)
    if n == 0:
        return x
    itemsize = jnp.dtype(dtype).itemsize

    gen = _chip_generation()

    # Generation-specific target block size (bytes of the I/O-dtype block).
    if gen in ("v5e", "v5"):
        max_block_bytes = 1 << 20      # stay inside v5's 16 MiB scoped-VMEM default
    elif gen == "v7":
        max_block_bytes = 4 << 20      # higher HBM BW -> amortize per-step overhead
    else:
        max_block_bytes = 2 << 20

    # bf16 compute where the VPU/EUP support it (v6e/v7x); f32 elsewhere.
    if dtype == jnp.bfloat16 and gen in ("v6", "v7", "other"):
        compute_dtype = jnp.bfloat16
    else:
        compute_dtype = jnp.float32

    # Sub-32-bit dtypes pack rows along sublanes: 8 (f32) / 16 (bf16) / 32 (i8).
    row_align = max(8, 32 // itemsize)

    # Lane-dense last dim.  Prefer the widest width that divides n exactly
    # (zero padding) and still yields >= row_align rows; otherwise the widest
    # width that yields >= row_align rows (tiny pad of < lanes elements).
    lane_candidates = (4096, 2048, 1024, 512, 256, _LANE)
    lanes = None
    for w in lane_candidates:
        if n % w == 0 and n // w >= row_align:
            lanes = w
            break
    if lanes is None:
        for w in lane_candidates:
            if pl.cdiv(n, w) >= row_align:
                lanes = w
                break
    if lanes is None:
        lanes = _LANE

    padded_n = _round_up(n, lanes)          # pad at most (lanes - 1) elements
    rows = padded_n // lanes

    # Rows per block: fill ~max_block_bytes, aligned to the packed sublane
    # multiple; the last grid block may be partial (no padding to full blocks).
    if rows < row_align:
        rows_per_block = rows               # block row dim == full array dim
    else:
        rows_per_block = (max_block_bytes // (lanes * itemsize)) // row_align * row_align
        rows_per_block = max(rows_per_block, row_align)
        max_aligned = (rows // row_align) * row_align
        rows_per_block = min(rows_per_block, max_aligned)
        if gen == "v7" and rows >= 2 * row_align:
            # 2 TensorCores per chip: keep grid >= 2 so both stream HBM.
            half = _round_up(pl.cdiv(rows, 2), row_align)
            rows_per_block = min(rows_per_block, max(half, row_align))

    grid = pl.cdiv(rows, rows_per_block)

    flat = x.reshape(-1)
    if padded_n != n:
        flat = jnp.pad(flat, (0, padded_n - n))
    x2d = flat.reshape(rows, lanes)

    cost = pl.CostEstimate(
        flops=5 * n,
        transcendentals=n,
        bytes_accessed=2 * n * itemsize,
    )

    compiler_kwargs = dict(dimension_semantics=("parallel",))
    if gen == "v7":
        # Explicit accounting: 2 bufs x (in + out) x 4 MiB = 16 MiB of I/O
        # buffers + elementwise temporaries; 48 MiB < 64 MiB physical per TC.
        compiler_kwargs["vmem_limit_bytes"] = 48 * 1024 * 1024

    out2d = pl.pallas_call(
        _make_swish_kernel(compute_dtype),
        out_shape=jax.ShapeDtypeStruct((rows, lanes), dtype),
        grid_spec=pltpu.PrefetchScalarGridSpec(
            num_scalar_prefetch=0,
            grid=(grid,),
            in_specs=[pl.BlockSpec((rows_per_block, lanes), lambda i: (i, 0))],
            out_specs=pl.BlockSpec((rows_per_block, lanes), lambda i: (i, 0)),
        ),
        compiler_params=pltpu.CompilerParams(**compiler_kwargs),
        cost_estimate=cost,
    )(x2d)

    out_flat = out2d.reshape(-1)
    if padded_n != n:
        out_flat = out_flat[:n]
    return out_flat.reshape(orig_shape)


if __name__ == "__main__":
    key = jax.random.PRNGKey(0)

    # Small shape consistent with the module: (batch, block_size, embeddings_dims)
    batch, seq, hidden = 2, 8, 384
    x = jax.random.normal(key, (batch, seq, hidden), dtype=jnp.float32)

    out = jax.block_until_ready(swish(x))
    ref = x * jax.nn.sigmoid(x)
    assert out.shape == x.shape and out.dtype == x.dtype
    assert jnp.max(jnp.abs(out - ref)) < 1e-4

    # Non-(8,128)-divisible element count: exercises the ragged / partial-block path.
    key2 = jax.random.PRNGKey(1)
    y = jax.random.normal(key2, (3, 7, 100), dtype=jnp.float32)
    out_y = jax.block_until_ready(swish(y))
    ref_y = y * jax.nn.sigmoid(y)
    assert out_y.shape == y.shape
    assert jnp.max(jnp.abs(out_y - ref_y)) < 1e-4

    print("KERNEL_OK")
</pallas_src>

<mosaic_0001>
module attributes {stable_mosaic.version = 11 : i64} {
  func.func @kernel(%arg0: i32, %arg1: memref<8x512xf32, #tpu.memory_space<vmem>>, %arg2: memref<8x512xf32, #tpu.memory_space<vmem>>) attributes {dimension_semantics = [#tpu.dimension_semantics<parallel>], iteration_bounds = array<i64: 2>, scalar_prefetch = 0 : i64, scratch_operands = 0 : i64, tpu.core_type = #tpu.core_type<tc>, window_params = [{transform_indices = @transform_0, window_bounds = array<i64: 8, 512>}, {transform_indices = @transform_1, window_bounds = array<i64: 8, 512>}]} {
    %c0 = arith.constant 0 : index
    %c0_0 = arith.constant 0 : index
    %0 = vector.load %arg1[%c0, %c0_0] : memref<8x512xf32, #tpu.memory_space<vmem>>, vector<8x512xf32>
    %cst = arith.constant 5.000000e-01 : f32
    %1 = vector.broadcast %cst : f32 to vector<8x512xf32>
    %2 = arith.mulf %0, %1 : vector<8x512xf32>
    %cst_1 = arith.constant 5.000000e-01 : f32
    %3 = vector.broadcast %cst_1 : f32 to vector<8x512xf32>
    %4 = arith.mulf %0, %3 : vector<8x512xf32>
    %5 = math.tanh %4 : vector<8x512xf32>
    %cst_2 = arith.constant 1.000000e+00 : f32
    %6 = vector.broadcast %cst_2 : f32 to vector<8x512xf32>
    %7 = arith.addf %5, %6 : vector<8x512xf32>
    %8 = arith.mulf %2, %7 : vector<8x512xf32>
    %c0_3 = arith.constant 0 : index
    %c0_4 = arith.constant 0 : index
    %9 = vector.load %arg2[%c0_3, %c0_4] : memref<8x512xf32, #tpu.memory_space<vmem>>, vector<8x512xf32>
    tpu.vector_store %arg2[%c0_3, %c0_4], %8 {strides = array<i32>} : memref<8x512xf32, #tpu.memory_space<vmem>>, vector<8x512xf32>,
    return
  }
  func.func @transform_0(%arg0: i32) -> (i32, i32) {
    %c0_i32 = arith.constant 0 : i32
    %c0_i32_0 = arith.constant 0 : i32
    return %arg0, %c0_i32 : i32, i32
  }
  func.func @transform_1(%arg0: i32) -> (i32, i32) {
    %c0_i32 = arith.constant 0 : i32
    %c0_i32_0 = arith.constant 0 : i32
    return %arg0, %c0_i32 : i32, i32
  }
}

</mosaic_0001>

<llo_original>
// kernel: tpu_custom_call.1
$region0: #{tpu_custom_call.1}
  #allocation0 [shape = 'u32[]', space=smem, size = 0x4, offset = 0x4, fixed_abs, tag = 'smem constant byte address 0x4 - core index']
  #allocation1 [shape = 'u32[144,128]{1,0:T(1,128)}', space=vmem, size = 0x12000, scoped, tag = 'internal scratch']
  %s0 = inlined_call_operand.hbm [shape: f32[12,512], index: 0, kind: input, shape index: {}]
  %s1 = inlined_call_operand.hbm [shape: f32[12,512], index: 1, kind: output, shape index: {}]
  %s2 = sld [smem:[#allocation0]]
  $region41: #{tpu_custom_call.1} parent=0
    _
  %s4 = ssub.s32 1, %s2
  %s5 = scalar_select 0, %s4, %s2
  $region1: #{tpu_custom_call.1} parent=0
    #allocation2 [shape = 'u8[32768]{0}', space=vmem, size = 0x8000, scoped, tag = 'input window, operand 0']
    #allocation3 [shape = 's32[2]{0}', space=sflag, size = 0x8, scoped, tag = 'scoped memory for tpu_custom_call.1']
    #allocation4 [shape = 's32[2]{0}', space=sflag, size = 0x8, scoped, tag = 'scoped memory for tpu_custom_call.1']
    #allocation5 [shape = 'u8[32768]{0}', space=vmem, size = 0x8000, scoped, tag = 'output window, operand 0']
    %6 = vsyncpa [#allocation3], 0
    %s7 = scalar_lea.sflag [#allocation3], 1
    %8 = vsyncpa %s7, 0
    %9 = vsyncpa [#allocation4], 0
    %s10 = scalar_lea.sflag [#allocation4], 1
    %11 = vsyncpa %s10, 0
    loop: start=0, step=1, limit=4
    $region2: #{tpu_custom_call.1} parent=1 // loop_pre_header
      _
    $region3: #{tpu_custom_call.1} parent=1 // loop_header
      %s13 = sphi 0, %s17
      %p14 = scmp.ge.s32.totalorder %s13, 4
      %s23 = sphi 0, %s25
      %s26 = sphi 0, %s23
      %s27 = sphi 0, %s26
      %s43 = sphi 0, %s27
      %s49 = sphi 0, %s51
      %s52 = sphi 0, %s49
      %s53 = sphi 0, %s52
      %s69 = sphi 0, %s53
    $region4: #{tpu_custom_call.1} parent=1 // loop_header_branch
      %16 = sbr.rel (%p14) target = $region8
    $region5: #{tpu_custom_call.1} parent=1 // loop_body
      %s18 = ssub.s32 %s13, 1
      %s19 = ssub.s32 %s13, 2
      %s20 = sadd.s32 %s13, 1
      %s21 = ssub.s32 %s13, %s20
      %p22 = scmp.eq.s32.totalorder %s21, 0
      %s24 = sadd.s32 %s23, 1
      %s25 = scalar_select %p22, %s23, %s24
      %p28 = pneg %p22
      %p29 = scmp.eq.s32.totalorder %s13, 1
      %p30 = por %p28, %p29
      %p31 = scmp.ne.s32.totalorder %s23, %s26
      %p32 = scmp.eq.s32.totalorder %s13, 0
      %p33 = por %p31, %p32
      %p34 = scmp.ne.s32.totalorder %s23, %s26
      %p35 = scmp.eq.s32.totalorder %s18, 1
      %p36 = por %p34, %p35
      %p37 = scmp.ne.s32.totalorder %s26, %s27
      %p38 = scmp.eq.s32.totalorder %s18, 0
      %p39 = por %p37, %p38
      %p40 = scmp.ne.s32.totalorder %s26, %s27
      %p41 = scmp.eq.s32.totalorder %s19, 1
      %p42 = por %p40, %p41
      %p44 = scmp.ne.s32.totalorder %s27, %s43
      %p45 = scmp.eq.s32.totalorder %s19, 0
      %p46 = por %p44, %p45
      %s47 = ssub.s32 %s13, %s20
      %p48 = scmp.eq.s32.totalorder %s47, 0
      %s50 = sadd.s32 %s49, 1
      %s51 = scalar_select %p48, %s49, %s50
      %p54 = pneg %p48
      %p55 = scmp.eq.s32.totalorder %s13, 1
      %p56 = por %p54, %p55
      %p57 = scmp.ne.s32.totalorder %s49, %s52
      %p58 = scmp.eq.s32.totalorder %s13, 0
      %p59 = por %p57, %p58
      %p60 = scmp.ne.s32.totalorder %s49, %s52
      %p61 = scmp.eq.s32.totalorder %s18, 1
      %p62 = por %p60, %p61
      %p63 = scmp.ne.s32.totalorder %s52, %s53
      %p64 = scmp.eq.s32.totalorder %s18, 0
      %p65 = por %p63, %p64
      %p66 = scmp.ne.s32.totalorder %s52, %s53
      %p67 = scmp.eq.s32.totalorder %s19, 1
      %p68 = por %p66, %p67
      %p70 = scmp.ne.s32.totalorder %s53, %s69
      %p71 = scmp.eq.s32.totalorder %s19, 0
      %p72 = por %p70, %p71
      %p73 = scmp.le.s32.totalorder 1, %s13
      %p74 = scmp.lt.s32.totalorder %s13, 3
      %p75 = pnand %p73, %p74
      %p76 = pneg %p75
      // Predicated region
      $region9: #{tpu_custom_call.1} parent=5 // pred_check
        _
      $region10: #{tpu_custom_call.1} parent=5 // pred_check_branch
        %78 = sbr.rel (%p75) target = $region12
      $region11: #{tpu_custom_call.1} parent=5 // pred_region
        %s79 = ssub.s32 %s13, 1
      $region12: #{tpu_custom_call.1} parent=5 // pred_fallthru
        _
      %p80 = scmp.lt.s32.totalorder %s13, 2
      // Predicated region
      $region13: #{tpu_custom_call.1} parent=5 // pred_check
        %p81 = pneg %p80
      $region14: #{tpu_custom_call.1} parent=5 // pred_check_branch
        %83 = sbr.rel (%p81) target = $region16
      $region15: #{tpu_custom_call.1} parent=5 // pred_region
        // Predicated region
        $region17: #{tpu_custom_call.1} parent=15 // pred_check
          %p84 = pneg %p33
        $region18: #{tpu_custom_call.1} parent=15 // pred_check_branch
          %86 = sbr.rel (%p84) target = $region20
        $region19: #{tpu_custom_call.1} parent=15 // pred_region
          %s87 = sand.u32 %s23, 1
          %s88 = scalar_lea.sflag [#allocation3], %s87
          %s89 = sand.u32 %s23, 1
          %s90 = smul.addr %s89, 32
          %s91 = scalar_lea.vmem [#allocation2], %s90
          %s93 = ssub.s32 512, 512
          %94 = vsyncadd %s88, %s93
          %s95 = smul.addr %s13, 4
          %s96 = smul.addr %s95, 128
          %s97 = scalar_lea.hbm %s0, %s96
          %s99 = sshll.u32 %s91, 4
          %s100 = int_to_ptr.vmem [resolvable:$true] %s99
          %102 = dma.hbm_to_vmem [thread:$0]  %s97, 512, %s100, %s88
        $region20: #{tpu_custom_call.1} parent=15 // pred_fallthru
          _
      $region16: #{tpu_custom_call.1} parent=5 // pred_fallthru
        _
      %p103 = scmp.le.s32.totalorder 1, %s13
      %p104 = scmp.lt.s32.totalorder %s13, 3
      %p105 = pnand %p103, %p104
      %p106 = pneg %p105
      // Predicated region
      $region21: #{tpu_custom_call.1} parent=5 // pred_check
        _
      $region22: #{tpu_custom_call.1} parent=5 // pred_check_branch
        %108 = sbr.rel (%p105) target = $region24
      $region23: #{tpu_custom_call.1} parent=5 // pred_region
        %s109 = ssub.s32 %s13, 1
        %s110 = sand.u32 %s26, 1
        %s111 = scalar_lea.sflag [#allocation3], %s110
        %s112 = sand.u32 %s26, 1
        %s113 = smul.addr %s112, 32
        %s114 = scalar_lea.vmem [#allocation2], %s113
        // Predicated region
        $region25: #{tpu_custom_call.1} parent=23 // pred_check
          %p115 = pneg %p39
        $region26: #{tpu_custom_call.1} parent=23 // pred_check_branch
          %117 = sbr.rel (%p115) target = $region28
        $region27: #{tpu_custom_call.1} parent=23 // pred_region
          %118 = dma.done %s111, 512
        $region28: #{tpu_custom_call.1} parent=23 // pred_fallthru
          _
        %s119 = sand.u32 %s26, 1
        %s120 = scalar_lea.sflag [#allocation3], %s119
        %s121 = sand.u32 %s26, 1
        %s122 = smul.addr %s121, 32
        %s123 = scalar_lea.vmem [#allocation2], %s122
        %p124 = pneg %p39
        %p125 = pneg %p36
        %p126 = pneg %p65
        %p127 = pneg %p62
        %s128 = sand.u32 %s52, 1
        %s129 = scalar_lea.sflag [#allocation4], %s128
        %s130 = sand.u32 %s52, 1
        %s131 = smul.addr %s130, 32
        %s132 = scalar_lea.vmem [#allocation5], %s131
        %v133 = vld [vmem:[%s114] sm:$0xff]
        %v134 = vld [vmem:[%s114 + $0x8] sm:$0xff]
        %v135 = vld [vmem:[%s114 + $0x10] sm:$0xff]
        %v136 = vld [vmem:[%s114 + $0x18] sm:$0xff]
        %v137 = vmul.f32 %v133, 0.5
        %v138 = vmul.f32 %v134, 0.5
        %v139 = vmul.f32 %v135, 0.5
        %v140 = vmul.f32 %v136, 0.5
        %v141 = vtanh.pop %v137
        %v142 = vtanh.pop %v138
        %v143 = vtanh.pop %v139
        %v144 = vtanh.pop %v140
        %v145 = vadd.f32 %v141, 1.0
        %v146 = vadd.f32 %v142, 1.0
        %v147 = vadd.f32 %v143, 1.0
        %v148 = vadd.f32 %v144, 1.0
        %v149 = vmul.f32 %v137, %v145
        %v150 = vmul.f32 %v138, %v146
        %v151 = vmul.f32 %v139, %v147
        %v152 = vmul.f32 %v140, %v148
        %153 = vst [vmem:[%s132] sm:$0xff] %v149
        %154 = vst [vmem:[%s132 + $0x8] sm:$0xff] %v150
        %155 = vst [vmem:[%s132 + $0x10] sm:$0xff] %v151
        %156 = vst [vmem:[%s132 + $0x18] sm:$0xff] %v152
        %s157 = sand.u32 %s52, 1
        %s158 = scalar_lea.sflag [#allocation4], %s157
        %s159 = sand.u32 %s52, 1
        %s160 = smul.addr %s159, 32
        %s161 = scalar_lea.vmem [#allocation5], %s160
        // Predicated region
        $region29: #{tpu_custom_call.1} parent=23 // pred_check
          %p162 = pneg %p62
        $region30: #{tpu_custom_call.1} parent=23 // pred_check_branch
          %164 = sbr.rel (%p162) target = $region32
        $region31: #{tpu_custom_call.1} parent=23 // pred_region
          %s166 = ssub.s32 512, 512
          %167 = vsyncadd %s158, %s166
          %s168 = smul.addr %s18, 4
          %s169 = smul.addr %s168, 128
          %s170 = scalar_lea.hbm %s1, %s169
          %s172 = sshll.u32 %s161, 4
          %s173 = int_to_ptr.vmem [resolvable:$true] %s172
          %175 = dma.vmem_to_hbm [thread:$0]  %s173, 512, %s170, %s158
        $region32: #{tpu_custom_call.1} parent=23 // pred_fallthru
          _
      $region24: #{tpu_custom_call.1} parent=5 // pred_fallthru
        _
      %p176 = scmp.le.s32.totalorder 2, %s13
      // Predicated region
      $region33: #{tpu_custom_call.1} parent=5 // pred_check
        %p177 = pneg %p176
      $region34: #{tpu_custom_call.1} parent=5 // pred_check_branch
        %179 = sbr.rel (%p177) target = $region36
      $region35: #{tpu_custom_call.1} parent=5 // pred_region
        %s180 = ssub.s32 %s13, 2
        // Predicated region
        $region37: #{tpu_custom_call.1} parent=35 // pred_check
          %p181 = pneg %p68
        $region38: #{tpu_custom_call.1} parent=35 // pred_check_branch
          %183 = sbr.rel (%p181) target = $region40
        $region39: #{tpu_custom_call.1} parent=35 // pred_region
          %s184 = sand.u32 %s53, 1
          %s185 = scalar_lea.sflag [#allocation4], %s184
          %s186 = sand.u32 %s53, 1
          %s187 = smul.addr %s186, 32
          %s188 = scalar_lea.vmem [#allocation5], %s187
          %189 = dma.done %s185, 512
        $region40: #{tpu_custom_call.1} parent=35 // pred_fallthru
          _
      $region36: #{tpu_custom_call.1} parent=5 // pred_fallthru
        _
    $region6: #{tpu_custom_call.1} parent=1 // loop_footer
      %s17 = sadd.s32 1, %s13
    $region7: #{tpu_custom_call.1} parent=1 // loop_footer_branch
      %12 = sbr.rel target = $region3
    $region8: #{tpu_custom_call.1} parent=1 // loop_exit
      _
    %190 = vsyncpa [#allocation3], 1
    %s191 = scalar_lea.sflag [#allocation3], 1
    %192 = vsyncpa %s191, 1
    %193 = vsyncpa [#allocation4], 1
    %s194 = scalar_lea.sflag [#allocation4], 1
    %195 = vsyncpa %s194, 1

</llo_original>
